<compile_context>
chip_gen: v6e
topology: v6e:2x2x1
jax: 0.10.0
libtpu: 0.0.40
codegen_flags: <defaults>
</compile_context>

<pallas_src>
import jax
import jax.numpy as jnp
from jax.experimental import pallas as pl
from jax.experimental.pallas import tpu as pltpu

STATE_DIM = 4          # CartPole-v0 observation dim
HIDDEN = [128, 256]


def _round_up(x, m):
    return (x + m - 1) // m * m


def critic_kernel(x_ref, w1_ref, b1_ref, w2_ref, b2_ref, w3_ref, b3_ref, o_ref):
    x = x_ref[...]                                        # (TB, 4)  f32
    w1 = w1_ref[...]                                      # (4, 128) f32

    # --- Layer 1 (K=4): 4 broadcast FMAs on the VPU (skip the padded MXU pass).
    h1 = x[:, 0:1] * w1[0:1, :]
    for k in range(1, STATE_DIM):
        h1 = h1 + x[:, k:k + 1] * w1[k:k + 1, :]
    h1 = jnp.maximum(h1 + b1_ref[...], 0.0)               # (TB, 128) f32

    # --- Layer 2 (128 -> 256): bf16 MXU matmul, f32 accumulation.
    h2 = jnp.dot(h1.astype(jnp.bfloat16), w2_ref[...],
                 preferred_element_type=jnp.float32)      # (TB, 256) f32
    h2 = jnp.maximum(h2 + b2_ref[...], 0.0)

    # --- Layer 3 (N=1): elementwise multiply + lane reduce on VPU/XLU.
    v = jnp.sum(h2 * w3_ref[...], axis=-1, keepdims=True) + b3_ref[0, 0]
    o_ref[...] = v.astype(o_ref.dtype)                    # (TB, 1)


def critic_forward(state, params, *, block_b=256):
    """state: (B, STATE_DIM) float32 -> value: (B, 1) float32."""
    w1, b1, w2, b2, w3, b3 = params
    B = state.shape[0]

    # Batch tile: sublane-aligned (multiple of 8), capped at block_b.
    TB = min(block_b, _round_up(max(B, 1), 8))
    Bp = _round_up(B, TB)
    if Bp != B:
        state = jnp.pad(state, ((0, Bp - B), (0, 0)))

    w2_bf16 = w2.astype(jnp.bfloat16)           # MXU operands in bf16
    w3_row = w3.reshape(1, HIDDEN[1])           # (256,1) -> (1,256) for the lane reduce
    b3_sc = b3.reshape(1, 1)                    # SMEM scalar

    const = lambda i: (0, 0)                    # weights resident across batch tiles

    out = pl.pallas_call(
        critic_kernel,
        out_shape=jax.ShapeDtypeStruct((Bp, 1), jnp.float32),
        grid=(Bp // TB,),
        in_specs=[
            pl.BlockSpec((TB, STATE_DIM), lambda i: (i, 0)),       # x (pipelined)
            pl.BlockSpec((STATE_DIM, HIDDEN[0]), const),           # w1
            pl.BlockSpec((1, HIDDEN[0]), const),                   # b1
            pl.BlockSpec((HIDDEN[0], HIDDEN[1]), const),           # w2 (bf16)
            pl.BlockSpec((1, HIDDEN[1]), const),                   # b2
            pl.BlockSpec((1, HIDDEN[1]), const),                   # w3 as a row
            pl.BlockSpec(memory_space=pltpu.MemorySpace.SMEM),     # b3 scalar
        ],
        out_specs=pl.BlockSpec((TB, 1), lambda i: (i, 0)),
        compiler_params=pltpu.CompilerParams(
            dimension_semantics=("parallel",)),  # shard batch tiles across v7x's 2 TCs
    )(state, w1, b1, w2_bf16, b2, w3_row, b3_sc)

    return out[:B]


def init_params(key):
    """Deterministic init mimicking nn.Linear defaults (uniform(+-1/sqrt(fan_in)))."""
    dims = [STATE_DIM] + HIDDEN + [1]   # 4 -> 128 -> 256 -> 1
    params = []
    for fan_in, fan_out in zip(dims[:-1], dims[1:]):
        key, kw, kb = jax.random.split(key, 3)
        bound = 1.0 / (fan_in ** 0.5)
        w = jax.random.uniform(kw, (fan_in, fan_out), jnp.float32, -bound, bound)
        b = jax.random.uniform(kb, (1, fan_out), jnp.float32, -bound, bound)
        params += [w, b]
    return tuple(params)


def critic_ref(state, params):
    """Pure-JAX f32 reference for correctness check."""
    w1, b1, w2, b2, w3, b3 = params
    h1 = jnp.maximum(state @ w1 + b1, 0.0)
    h2 = jnp.maximum(h1 @ w2 + b2, 0.0)
    return h2 @ w3 + b3


if __name__ == "__main__":
    key = jax.random.PRNGKey(0)
    key, kx1, kx2 = jax.random.split(key, 3)
    params = init_params(key)

    # Small batch: single tile, grid=(1,).
    B1 = 8
    s1 = jax.random.normal(kx1, (B1, STATE_DIM), jnp.float32)
    v1 = jax.block_until_ready(critic_forward(s1, params))
    assert v1.shape == (B1, 1)
    assert jnp.allclose(v1, critic_ref(s1, params), atol=5e-3, rtol=2e-2), "B=8 mismatch"

    # Larger, non-multiple batch: exercises padding + multi-tile pipelined grid.
    B2 = 300
    s2 = jax.random.normal(kx2, (B2, STATE_DIM), jnp.float32)
    v2 = jax.block_until_ready(critic_forward(s2, params, block_b=128))
    assert v2.shape == (B2, 1)
    assert jnp.allclose(v2, critic_ref(s2, params), atol=5e-3, rtol=2e-2), "B=300 mismatch"

    print("KERNEL_OK")
</pallas_src>

<mosaic_0001>
module attributes {stable_mosaic.version = 11 : i64} {
  func.func @critic_kernel(%arg0: i32, %arg1: memref<8x4xf32, #tpu.memory_space<vmem>>, %arg2: memref<4x128xf32, #tpu.memory_space<vmem>>, %arg3: memref<1x128xf32, #tpu.memory_space<vmem>>, %arg4: memref<128x256xbf16, #tpu.memory_space<vmem>>, %arg5: memref<1x256xf32, #tpu.memory_space<vmem>>, %arg6: memref<1x256xf32, #tpu.memory_space<vmem>>, %arg7: memref<1x1xf32, #tpu.memory_space<smem>>, %arg8: memref<8x1xf32, #tpu.memory_space<vmem>>) attributes {dimension_semantics = [#tpu.dimension_semantics<parallel>], iteration_bounds = array<i64: 1>, scalar_prefetch = 0 : i64, scratch_operands = 0 : i64, tpu.core_type = #tpu.core_type<tc>, window_params = [{transform_indices = @transform_0, window_bounds = array<i64: 8, 4>}, {pipeline_mode = #tpu.pipeline_mode<synchronous>, transform_indices = @transform_1, window_bounds = array<i64: 4, 128>}, {pipeline_mode = #tpu.pipeline_mode<synchronous>, transform_indices = @transform_2, window_bounds = array<i64: 1, 128>}, {pipeline_mode = #tpu.pipeline_mode<synchronous>, transform_indices = @transform_3, window_bounds = array<i64: 128, 256>}, {pipeline_mode = #tpu.pipeline_mode<synchronous>, transform_indices = @transform_4, window_bounds = array<i64: 1, 256>}, {pipeline_mode = #tpu.pipeline_mode<synchronous>, transform_indices = @transform_5, window_bounds = array<i64: 1, 256>}, {transform_indices = @transform_6, window_bounds = array<i64: 1, 1>}, {transform_indices = @transform_7, window_bounds = array<i64: 8, 1>}]} {
    %c0 = arith.constant 0 : index
    %c0_0 = arith.constant 0 : index
    %0 = vector.load %arg1[%c0, %c0_0] : memref<8x4xf32, #tpu.memory_space<vmem>>, vector<8x4xf32>
    %c0_1 = arith.constant 0 : index
    %c0_2 = arith.constant 0 : index
    %1 = vector.load %arg2[%c0_1, %c0_2] : memref<4x128xf32, #tpu.memory_space<vmem>>, vector<4x128xf32>
    %2 = vector.extract_strided_slice %0 {offsets = [0, 0], sizes = [8, 1], strides = [1, 1]} : vector<8x4xf32> to vector<8x1xf32>
    %3 = vector.extract_strided_slice %1 {offsets = [0, 0], sizes = [1, 128], strides = [1, 1]} : vector<4x128xf32> to vector<1x128xf32>
    %4 = vector.broadcast %2 : vector<8x1xf32> to vector<8x128xf32>
    %5 = vector.broadcast %3 : vector<1x128xf32> to vector<8x128xf32>
    %6 = arith.mulf %4, %5 : vector<8x128xf32>
    %7 = vector.extract_strided_slice %0 {offsets = [0, 1], sizes = [8, 1], strides = [1, 1]} : vector<8x4xf32> to vector<8x1xf32>
    %8 = vector.extract_strided_slice %1 {offsets = [1, 0], sizes = [1, 128], strides = [1, 1]} : vector<4x128xf32> to vector<1x128xf32>
    %9 = vector.broadcast %7 : vector<8x1xf32> to vector<8x128xf32>
    %10 = vector.broadcast %8 : vector<1x128xf32> to vector<8x128xf32>
    %11 = arith.mulf %9, %10 : vector<8x128xf32>
    %12 = arith.addf %6, %11 : vector<8x128xf32>
    %13 = vector.extract_strided_slice %0 {offsets = [0, 2], sizes = [8, 1], strides = [1, 1]} : vector<8x4xf32> to vector<8x1xf32>
    %14 = vector.extract_strided_slice %1 {offsets = [2, 0], sizes = [1, 128], strides = [1, 1]} : vector<4x128xf32> to vector<1x128xf32>
    %15 = vector.broadcast %13 : vector<8x1xf32> to vector<8x128xf32>
    %16 = vector.broadcast %14 : vector<1x128xf32> to vector<8x128xf32>
    %17 = arith.mulf %15, %16 : vector<8x128xf32>
    %18 = arith.addf %12, %17 : vector<8x128xf32>
    %19 = vector.extract_strided_slice %0 {offsets = [0, 3], sizes = [8, 1], strides = [1, 1]} : vector<8x4xf32> to vector<8x1xf32>
    %20 = vector.extract_strided_slice %1 {offsets = [3, 0], sizes = [1, 128], strides = [1, 1]} : vector<4x128xf32> to vector<1x128xf32>
    %21 = vector.broadcast %19 : vector<8x1xf32> to vector<8x128xf32>
    %22 = vector.broadcast %20 : vector<1x128xf32> to vector<8x128xf32>
    %23 = arith.mulf %21, %22 : vector<8x128xf32>
    %24 = arith.addf %18, %23 : vector<8x128xf32>
    %c0_3 = arith.constant 0 : index
    %c0_4 = arith.constant 0 : index
    %25 = vector.load %arg3[%c0_3, %c0_4] : memref<1x128xf32, #tpu.memory_space<vmem>>, vector<1x128xf32>
    %26 = vector.broadcast %25 : vector<1x128xf32> to vector<8x128xf32>
    %27 = arith.addf %24, %26 : vector<8x128xf32>
    %cst = arith.constant 0.000000e+00 : f32
    %28 = vector.broadcast %cst : f32 to vector<8x128xf32>
    %29 = arith.maximumf %27, %28 : vector<8x128xf32>
    %30 = arith.truncf %29 : vector<8x128xf32> to vector<8x128xbf16>
    %c0_5 = arith.constant 0 : index
    %c0_6 = arith.constant 0 : index
    %31 = vector.load %arg4[%c0_5, %c0_6] : memref<128x256xbf16, #tpu.memory_space<vmem>>, vector<128x256xbf16>
    %cst_7 = arith.constant dense<0.000000e+00> : vector<8x256xf32>
    %32 = tpu.matmul %30, %31, %cst_7 {dimension_numbers = #tpu.dot_dimension_numbers<[1], [0], [0], [1], [0, 0, 1, 1], [], []>} : vector<8x128xbf16>, vector<128x256xbf16>, vector<8x256xf32> -> vector<8x256xf32>
    %c0_8 = arith.constant 0 : index
    %c0_9 = arith.constant 0 : index
    %33 = vector.load %arg5[%c0_8, %c0_9] : memref<1x256xf32, #tpu.memory_space<vmem>>, vector<1x256xf32>
    %34 = vector.broadcast %33 : vector<1x256xf32> to vector<8x256xf32>
    %35 = arith.addf %32, %34 : vector<8x256xf32>
    %cst_10 = arith.constant 0.000000e+00 : f32
    %36 = vector.broadcast %cst_10 : f32 to vector<8x256xf32>
    %37 = arith.maximumf %35, %36 : vector<8x256xf32>
    %c0_11 = arith.constant 0 : index
    %c0_12 = arith.constant 0 : index
    %38 = vector.load %arg6[%c0_11, %c0_12] : memref<1x256xf32, #tpu.memory_space<vmem>>, vector<1x256xf32>
    %39 = vector.broadcast %38 : vector<1x256xf32> to vector<8x256xf32>
    %40 = arith.mulf %37, %39 : vector<8x256xf32>
    %cst_13 = arith.constant dense<0.000000e+00> : vector<8xf32>
    %41 = vector.multi_reduction <add>, %40, %cst_13 [1] : vector<8x256xf32> to vector<8xf32>
    %42 = vector.shape_cast %41 : vector<8xf32> to vector<8x1xf32>
    %c0_14 = arith.constant 0 : index
    %c0_15 = arith.constant 0 : index
    %43 = memref.load %arg7[%c0_14, %c0_15] : memref<1x1xf32, #tpu.memory_space<smem>>
    %44 = vector.broadcast %43 : f32 to vector<8x1xf32>
    %45 = arith.addf %42, %44 : vector<8x1xf32>
    %c0_16 = arith.constant 0 : index
    %c0_17 = arith.constant 0 : index
    %46 = vector.load %arg8[%c0_16, %c0_17] : memref<8x1xf32, #tpu.memory_space<vmem>>, vector<8x1xf32>
    tpu.vector_store %arg8[%c0_16, %c0_17], %45 {strides = array<i32>} : memref<8x1xf32, #tpu.memory_space<vmem>>, vector<8x1xf32>,
    return
  }
  func.func @transform_0(%arg0: i32) -> (i32, i32) {
    %c0_i32 = arith.constant 0 : i32
    %c0_i32_0 = arith.constant 0 : i32
    return %arg0, %c0_i32 : i32, i32
  }
  func.func @transform_1(%arg0: i32) -> (i32, i32) {
    %c0_i32 = arith.constant 0 : i32
    %c0_i32_0 = arith.constant 0 : i32
    %c0_i32_1 = arith.constant 0 : i32
    return %c0_i32, %c0_i32_0 : i32, i32
  }
  func.func @transform_2(%arg0: i32) -> (i32, i32) {
    %c0_i32 = arith.constant 0 : i32
    %c0_i32_0 = arith.constant 0 : i32
    %c0_i32_1 = arith.constant 0 : i32
    return %c0_i32, %c0_i32_0 : i32, i32
  }
  func.func @transform_3(%arg0: i32) -> (i32, i32) {
    %c0_i32 = arith.constant 0 : i32
    %c0_i32_0 = arith.constant 0 : i32
    %c0_i32_1 = arith.constant 0 : i32
    return %c0_i32, %c0_i32_0 : i32, i32
  }
  func.func @transform_4(%arg0: i32) -> (i32, i32) {
    %c0_i32 = arith.constant 0 : i32
    %c0_i32_0 = arith.constant 0 : i32
    %c0_i32_1 = arith.constant 0 : i32
    return %c0_i32, %c0_i32_0 : i32, i32
  }
  func.func @transform_5(%arg0: i32) -> (i32, i32) {
    %c0_i32 = arith.constant 0 : i32
    %c0_i32_0 = arith.constant 0 : i32
    %c0_i32_1 = arith.constant 0 : i32
    return %c0_i32, %c0_i32_0 : i32, i32
  }
  func.func @transform_6(%arg0: i32) -> (i32, i32) {
    %c0_i32 = arith.constant 0 : i32
    %c0_i32_0 = arith.constant 0 : i32
    %c0_i32_1 = arith.constant 0 : i32
    return %c0_i32, %c0_i32_0 : i32, i32
  }
  func.func @transform_7(%arg0: i32) -> (i32, i32) {
    %c0_i32 = arith.constant 0 : i32
    %c0_i32_0 = arith.constant 0 : i32
    return %arg0, %c0_i32 : i32, i32
  }
}

</mosaic_0001>

<llo_original>
// kernel: tpu_custom_call.1
$region0: #{tpu_custom_call.1}
  #allocation0 [shape = 'u32[]', space=smem, size = 0x4, offset = 0x4, fixed_abs, tag = 'smem constant byte address 0x4 - core index']
  #allocation1 [shape = 'u32[144,128]{1,0:T(1,128)}', space=vmem, size = 0x12000, scoped, tag = 'internal scratch']
  #allocation2 [shape = 'f32[1,1]{1,0:T(1,128)S(6)}', space=smem, size = 0x200, scoped, tag = 'scoped memory for tpu_custom_call.1']
  %s0 = inlined_call_operand.vmem [shape: f32[8,4], index: 0, kind: input, shape index: {}]
  %s1 = inlined_call_operand.vmem [shape: f32[4,128], index: 1, kind: input, shape index: {}]
  %s2 = inlined_call_operand.vmem [shape: f32[1,128], index: 2, kind: input, shape index: {}]
  %s3 = inlined_call_operand.hbm [shape: bf16[128,256], index: 3, kind: input, shape index: {}]
  %s4 = inlined_call_operand.vmem [shape: f32[1,256], index: 4, kind: input, shape index: {}]
  %s5 = inlined_call_operand.vmem [shape: f32[1,256], index: 5, kind: input, shape index: {}]
  %s6 = inlined_call_operand.<no memory space> [shape: f32[1,1], index: 6, kind: input, shape index: {}]
  %s7 = inlined_call_operand.vmem [shape: f32[8,1], index: 7, kind: output, shape index: {}]
  %s8 = sld [smem:[#allocation0]]
  $region42: #{tpu_custom_call.1} parent=0
    _
  %s10 = ssub.s32 1, %s8
  %s11 = scalar_select 0, %s10, %s8
  %12 = sst [smem:[#allocation2]] %s6
  $region1: #{tpu_custom_call.1} parent=0
    #allocation3 [shape = 'u8[65536]{0}', space=vmem, size = 0x10000, scoped, tag = 'input window, operand 3, single buffered']
    #allocation4 [shape = 's32[1]{0}', space=sflag, size = 0x4, scoped, tag = 'scoped memory for tpu_custom_call.1']
    %13 = vsyncpa [#allocation4], 0
    // Predicated region
    $region2: #{tpu_custom_call.1} parent=1 // pred_check
      _
    $region3: #{tpu_custom_call.1} parent=1 // pred_check_branch
      %15 = sbr.rel (0) target = $region5
    $region4: #{tpu_custom_call.1} parent=1 // pred_region
      _
    $region5: #{tpu_custom_call.1} parent=1 // pred_fallthru
      _
    // Predicated region
    $region6: #{tpu_custom_call.1} parent=1 // pred_check
      _
    $region7: #{tpu_custom_call.1} parent=1 // pred_check_branch
      %17 = sbr.rel (0) target = $region9
    $region8: #{tpu_custom_call.1} parent=1 // pred_region
      _
    $region9: #{tpu_custom_call.1} parent=1 // pred_fallthru
      _
    // Predicated region
    $region10: #{tpu_custom_call.1} parent=1 // pred_check
      _
    $region11: #{tpu_custom_call.1} parent=1 // pred_check_branch
      %19 = sbr.rel (0) target = $region13
    $region12: #{tpu_custom_call.1} parent=1 // pred_region
      _
    $region13: #{tpu_custom_call.1} parent=1 // pred_fallthru
      _
    // Predicated region
    $region14: #{tpu_custom_call.1} parent=1 // pred_check
      _
    $region15: #{tpu_custom_call.1} parent=1 // pred_check_branch
      %21 = sbr.rel (0) target = $region17
    $region16: #{tpu_custom_call.1} parent=1 // pred_region
      %s23 = ssub.s32 2048, 2048
      %24 = vsyncadd [#allocation4], %s23
      %s25 = sshll.u32 [#allocation3], 4
      %s26 = int_to_ptr.vmem [resolvable:$true] %s25
      %31 = dma.hbm_to_vmem [thread:$0]  %s3, 2048, %s26, [#allocation4], 128, 128, 8
    $region17: #{tpu_custom_call.1} parent=1 // pred_fallthru
      _
    // Predicated region
    $region18: #{tpu_custom_call.1} parent=1 // pred_check
      _
    $region19: #{tpu_custom_call.1} parent=1 // pred_check_branch
      %33 = sbr.rel (0) target = $region21
    $region20: #{tpu_custom_call.1} parent=1 // pred_region
      _
    $region21: #{tpu_custom_call.1} parent=1 // pred_fallthru
      _
    // Predicated region
    $region22: #{tpu_custom_call.1} parent=1 // pred_check
      _
    $region23: #{tpu_custom_call.1} parent=1 // pred_check_branch
      %35 = sbr.rel (0) target = $region25
    $region24: #{tpu_custom_call.1} parent=1 // pred_region
      _
    $region25: #{tpu_custom_call.1} parent=1 // pred_fallthru
      _
    // Predicated region
    $region26: #{tpu_custom_call.1} parent=1 // pred_check
      _
    $region27: #{tpu_custom_call.1} parent=1 // pred_check_branch
      %37 = sbr.rel (0) target = $region29
    $region28: #{tpu_custom_call.1} parent=1 // pred_region
      _
    $region29: #{tpu_custom_call.1} parent=1 // pred_fallthru
      _
    // Predicated region
    $region30: #{tpu_custom_call.1} parent=1 // pred_check
      _
    $region31: #{tpu_custom_call.1} parent=1 // pred_check_branch
      %39 = sbr.rel (0) target = $region33
    $region32: #{tpu_custom_call.1} parent=1 // pred_region
      %40 = dma.done [#allocation4], 2048
    $region33: #{tpu_custom_call.1} parent=1 // pred_fallthru
      _
    %v42 = vld [vmem:[%s0] sm:$0xff]
    %v43 = vld [vmem:[%s1] sm:$0xf]
    %45 = vset.pattern.permute.xlu0 0
    %46 = vperm.xlu0 %45, %v42
    %v47 = vpop.permute.xlu0 %46
    %v49 = vlaneseq
    %v50 = vshrl.u32 %v49, 7
    %v51 = vsub.s32 0, %v50
    %v52 = vrot.slane %v43, %v51
    %v53 = vmul.f32 %v47, %v52
    %54 = vset.pattern.permute.xlu0 1
    %55 = vperm.xlu0 %54, %v42
    %v56 = vpop.permute.xlu0 %55
    %v58 = vlaneseq
    %v59 = vshrl.u32 %v58, 7
    %v60 = vsub.s32 1, %v59
    %v61 = vrot.slane %v43, %v60
    %v62 = vmul.f32 %v56, %v61
    %v63 = vadd.f32 %v53, %v62
    %64 = vset.pattern.permute.xlu0 2
    %65 = vperm.xlu0 %64, %v42
    %v66 = vpop.permute.xlu0 %65
    %v68 = vlaneseq
    %v69 = vshrl.u32 %v68, 7
    %v70 = vsub.s32 2, %v69
    %v71 = vrot.slane %v43, %v70
    %v72 = vmul.f32 %v66, %v71
    %v73 = vadd.f32 %v63, %v72
    %74 = vset.pattern.permute.xlu0 3
    %75 = vperm.xlu0 %74, %v42
    %v76 = vpop.permute.xlu0 %75
    %v78 = vlaneseq
    %v79 = vshrl.u32 %v78, 7
    %v80 = vsub.s32 3, %v79
    %v81 = vrot.slane %v43, %v80
    %v82 = vmul.f32 %v76, %v81
    %v83 = vadd.f32 %v73, %v82
    %v84 = vld [vmem:[%s2] sm:$0x1]
    %v86 = vlaneseq
    %v87 = vshrl.u32 %v86, 7
    %v88 = vsub.s32 0, %v87
    %v89 = vrot.slane %v84, %v88
    %v91 = vadd.f32 %v83, %v89
    %v92 = vmax.f32 %v91, 0.0
    %v93 = vpack.c.bf16 %v92, %v92
    %v94 = vld [vmem:[#allocation3] sm:$0xff]
    %v95 = vld [vmem:[#allocation3 + $0x8] sm:$0xff]
    %v96 = vld [vmem:[#allocation3 + $0x10] sm:$0xff]
    %v97 = vld [vmem:[#allocation3 + $0x18] sm:$0xff]
    %v98 = vld [vmem:[#allocation3 + $0x20] sm:$0xff]
    %v99 = vld [vmem:[#allocation3 + $0x28] sm:$0xff]
    %v100 = vld [vmem:[#allocation3 + $0x30] sm:$0xff]
    %v101 = vld [vmem:[#allocation3 + $0x38] sm:$0xff]
    %v102 = vld [vmem:[#allocation3 + $0x40] sm:$0xff]
    %v103 = vld [vmem:[#allocation3 + $0x48] sm:$0xff]
    %v104 = vld [vmem:[#allocation3 + $0x50] sm:$0xff]
    %v105 = vld [vmem:[#allocation3 + $0x58] sm:$0xff]
    %v106 = vld [vmem:[#allocation3 + $0x60] sm:$0xff]
    %v107 = vld [vmem:[#allocation3 + $0x68] sm:$0xff]
    %v108 = vld [vmem:[#allocation3 + $0x70] sm:$0xff]
    %v109 = vld [vmem:[#allocation3 + $0x78] sm:$0xff]
    %v110 = vld [vmem:[%s4] sm:$0x3]
    %v112 = vlaneseq
    %v113 = vshrl.u32 %v112, 7
    %v114 = vsub.s32 0, %v113
    %v115 = vrot.slane %v110, %v114
    %v116 = vlaneseq
    %v117 = vshrl.u32 %v116, 7
    %v118 = vsub.s32 1, %v117
    %v119 = vrot.slane %v110, %v118
    %v138 = vunpack.c.l.b16 %v94
    %v139 = vunpack.c.h.b16 %v94
    %v140 = vunpack.c.l.b16 %v95
    %v141 = vunpack.c.h.b16 %v95
    %v142 = vunpack.c.l.b16 %v96
    %v143 = vunpack.c.h.b16 %v96
    %v144 = vunpack.c.l.b16 %v97
    %v145 = vunpack.c.h.b16 %v97
    %v146 = vunpack.c.l.b16 %v98
    %v147 = vunpack.c.h.b16 %v98
    %v148 = vunpack.c.l.b16 %v99
    %v149 = vunpack.c.h.b16 %v99
    %v150 = vunpack.c.l.b16 %v100
    %v151 = vunpack.c.h.b16 %v100
    %v152 = vunpack.c.l.b16 %v101
    %v153 = vunpack.c.h.b16 %v101
    %v154 = vunpack.c.l.b16 %v102
    %v155 = vunpack.c.h.b16 %v102
    %v156 = vunpack.c.l.b16 %v103
    %v157 = vunpack.c.h.b16 %v103
    %v158 = vunpack.c.l.b16 %v104
    %v159 = vunpack.c.h.b16 %v104
    %v160 = vunpack.c.l.b16 %v105
    %v161 = vunpack.c.h.b16 %v105
    %v162 = vunpack.c.l.b16 %v106
    %v163 = vunpack.c.h.b16 %v106
    %v164 = vunpack.c.l.b16 %v107
    %v165 = vunpack.c.h.b16 %v107
    %v166 = vunpack.c.l.b16 %v108
    %v167 = vunpack.c.h.b16 %v108
    %v168 = vunpack.c.l.b16 %v109
    %v169 = vunpack.c.h.b16 %v109
    %v170 = vpack.c.b16 %v140, %v138
    %v171 = vpack.c.b16 %v141, %v139
    %v172 = vpack.c.b16 %v144, %v142
    %v173 = vpack.c.b16 %v145, %v143
    %v174 = vpack.c.b16 %v148, %v146
    %v175 = vpack.c.b16 %v149, %v147
    %v176 = vpack.c.b16 %v152, %v150
    %v177 = vpack.c.b16 %v153, %v151
    %v178 = vpack.c.b16 %v156, %v154
    %v179 = vpack.c.b16 %v157, %v155
    %v180 = vpack.c.b16 %v160, %v158
    %v181 = vpack.c.b16 %v161, %v159
    %v182 = vpack.c.b16 %v164, %v162
    %v183 = vpack.c.b16 %v165, %v163
    %v184 = vpack.c.b16 %v168, %v166
    %v185 = vpack.c.b16 %v169, %v167
    %202 = vmatprep.subr.bf16.mxu0 %v185
    %203 = vmatpush1.bf16.msra.mxu0 %v184
    %204 = vmatprep.subr.bf16.mxu0 %v183
    %205 = vmatpush1.bf16.msra.mxu0 %v182
    %206 = vmatprep.subr.bf16.mxu0 %v181
    %207 = vmatpush1.bf16.msra.mxu0 %v180
    %208 = vmatprep.subr.bf16.mxu0 %v179
    %209 = vmatpush1.bf16.msra.mxu0 %v178
    %210 = vmatprep.subr.bf16.mxu0 %v177
    %211 = vmatpush1.bf16.msra.mxu0 %v176
    %212 = vmatprep.subr.bf16.mxu0 %v175
    %213 = vmatpush1.bf16.msra.mxu0 %v174
    %214 = vmatprep.subr.bf16.mxu0 %v173
    %215 = vmatpush1.bf16.msra.mxu0 %v172
    %216 = vmatprep.subr.bf16.mxu0 %v171
    %217 = vmatpush1.bf16.msra.mxu0 %v170
    %218 = vmatprep.subr.bf16.mxu0 0
    %219 = vmatpush2.bf16.msra.mxu0 0
    %220 = vmatprep.subr.bf16.mxu0 0
    %221 = vmatpush2.bf16.msra.mxu0 0
    %222 = vmatprep.subr.bf16.mxu0 0
    %223 = vmatpush2.bf16.msra.mxu0 0
    %224 = vmatprep.subr.bf16.mxu0 0
    %225 = vmatpush2.bf16.msra.mxu0 0
    %226 = vmatprep.subr.bf16.mxu0 0
    %227 = vmatpush2.bf16.msra.mxu0 0
    %228 = vmatprep.subr.bf16.mxu0 0
    %229 = vmatpush2.bf16.msra.mxu0 0
    %230 = vmatprep.subr.bf16.mxu0 0
    %231 = vmatpush2.bf16.msra.mxu0 0
    %232 = vmatprep.subr.bf16.mxu0 0
    %233 = vmatpush2.bf16.msra.mxu0 0
    %234 = vmatprep.mubr.bf16.mxu0 0
    %235 = vmatmul.mubr.bf16.gmra.mxu0 %v93
    %v236 = vpop.f32.mrf.mxu0
    %v237 = vadd.f32 %v115, %v236
    %v238 = vpop.f32.mrf.mxu0
    %v239 = vadd.f32 %v119, %v238
    %v240 = vpop.f32.mrf.mxu0
    %v241 = vpop.f32.mrf.mxu0
    %242 = vdwg.mxu0
    %v243 = vmax.f32 %v237, 0.0
    %v244 = vmax.f32 %v239, 0.0
    %v245 = vld [vmem:[%s5] sm:$0x3]
    %v247 = vlaneseq
    %v248 = vshrl.u32 %v247, 7
    %v249 = vsub.s32 0, %v248
    %v250 = vrot.slane %v245, %v249
    %v251 = vlaneseq
    %v252 = vshrl.u32 %v251, 7
    %v253 = vsub.s32 1, %v252
    %v254 = vrot.slane %v245, %v253
    %v257 = vmul.f32 %v243, %v250
    %v258 = vmul.f32 %v244, %v254
    %v259 = vadd.f32 %v257, %v258
    %260 = vadd.xlane.f32.xlu0 %v259
    %v261 = vpop.xlane.xlu0 %260
    %s262 = sld [smem:[#allocation2]]
    %v263 = vstv %s262
    %v264 = vadd.f32 %v261, %v263
    %vm265 = vcmask 7168
    %266 = vst.msk [vmem:[%s7] sm:$0xff] %vm265, %v264
    // Predicated region
    $region34: #{tpu_custom_call.1} parent=1 // pred_check
      _
    $region35: #{tpu_custom_call.1} parent=1 // pred_check_branch
      %268 = sbr.rel (0) target = $region37
    $region36: #{tpu_custom_call.1} parent=1 // pred_region
      _
    $region37: #{tpu_custom_call.1} parent=1 // pred_fallthru
      _
    // Predicated region
    $region38: #{tpu_custom_call.1} parent=1 // pred_check
      _
    $region39: #{tpu_custom_call.1} parent=1 // pred_check_branch
      %270 = sbr.rel (0) target = $region41
    $region40: #{tpu_custom_call.1} parent=1 // pred_region
      _
    $region41: #{tpu_custom_call.1} parent=1 // pred_fallthru
      _
    %271 = vsyncpa [#allocation4], 1

</llo_original>
